<compile_context>
chip_gen: v5e
topology: v5e:2x2
jax: 0.10.0
libtpu: 0.0.40
codegen_flags: <defaults>
</compile_context>

<pallas_src>
import functools

import jax
import jax.numpy as jnp
from jax.experimental import pallas as pl
from jax.experimental.pallas import tpu as pltpu


def _round_up(x, m):
    return (x + m - 1) // m * m


# ----------------------------------------------------------------------------
# Fused kernel: streamed average pool (reduction over hw grid axis) + head.
# ----------------------------------------------------------------------------
def _fused_kernel(x_ref, sel_ref, wrep_ref, bd_ref, wcat_ref, bcat_ref,
                  wgt_ref, w1_ref, b1_ref, w2_ref, b2_ref,
                  dama_out_ref, tcm_out_ref, misc_out_ref,
                  pool_acc,
                  *, dama_dim, hw_total, hw_tile, ragged):
    k = pl.program_id(1)                       # hw-tile index (reduction axis)
    nk = pl.num_programs(1)

    @pl.when(k == 0)
    def _init():
        pool_acc[...] = jnp.zeros_like(pool_acc)

    # --- DAMA stand-in, part 1: streamed per-(batch, channel) row sums ------
    # Frames arrive as f32 (no wrapper cast) in (B*C, HW) layout: dense
    # sublanes, pixels on lanes -> straight lane reduce + large contiguous DMA.
    x = x_ref[...]                                              # (RT, hw_tile)
    if ragged:
        # Only the final hw block extends past HW; its padding lanes are
        # undefined (Pallas does not zero them), so mask before accumulating.
        lane = jax.lax.broadcasted_iota(jnp.int32, x.shape, 1)
        valid = hw_total - k * hw_tile          # >= hw_tile except last block
        x = jnp.where(lane < valid, x, 0.0)
    pool_acc[...] += jnp.sum(x, axis=-1, keepdims=True)         # (RT, 1) f32

    @pl.when(k == nk - 1)
    def _finalize():
        D = dama_dim
        # --- DAMA stand-in, part 2: mean -> Linear(C, D) -> ReLU ------------
        # wrep replicates w_dama per (batch, channel) row with the 1/HW mean
        # factor folded in; sel is the (Bt, RT) group-sum selector, so
        #   dama = relu(sel @ (row_sums * wrep) + b)
        # folds channels back per batch row with no sublane->lane reshape.
        # TODO(synk): real DAMA module source not provided; synthetic extractor
        prod = pool_acc[...] * wrep_ref[...]                    # (RT, D)
        dama = jnp.maximum(
            jnp.dot(sel_ref[...], prod, preferred_element_type=jnp.float32)
            + bd_ref[...], 0.0)                                 # (Bt, D)

        # --- TCM stand-in + dama-half of the gate: ONE wide MXU pass --------
        # wcat = [w_tcm (D,D) | w_inc (D,1) | w_gate[:D] (D,2) | 0-pad]
        # TODO(synk): real TCM module source not provided; synthetic branch
        big = jnp.dot(dama, wcat_ref[...],
                      preferred_element_type=jnp.float32) + bcat_ref[...]
        tcm = jnp.tanh(big[:, :D])                              # (Bt, D)
        inc = 1.0 / (1.0 + jnp.exp(-big[:, D:D + 1]))           # exact sigmoid

        # --- fusion gate: softmax over 2 logits == sigmoid(l0 - l1) ---------
        gate_logits = big[:, D + 1:D + 3] + jnp.dot(
            tcm, wgt_ref[...], preferred_element_type=jnp.float32)  # (Bt, 2)
        g0 = 1.0 / (1.0 + jnp.exp(-(gate_logits[:, 0:1] - gate_logits[:, 1:2])))
        g1 = 1.0 - g0
        fused = g0 * dama + g1 * tcm                            # (Bt, D)

        # --- classifier: Linear(D,256) -> ReLU -> Dropout(eval) -> Linear ---
        h = jnp.maximum(
            jnp.dot(fused, w1_ref[...], preferred_element_type=jnp.float32)
            + b1_ref[...], 0.0)
        logits = jnp.dot(h, w2_ref[...],
                         preferred_element_type=jnp.float32) + b2_ref[...]

        dama_out_ref[...] = dama
        tcm_out_ref[...] = tcm
        # lane-dense output slab: [logits(2) | inconsistency(1) | zeros]
        pad = jnp.zeros((logits.shape[0], misc_out_ref.shape[-1] - 3),
                        jnp.float32)
        misc_out_ref[...] = jnp.concatenate([logits, inc, pad], axis=-1)


# ----------------------------------------------------------------------------
# Tiling helpers
# ----------------------------------------------------------------------------
def _vmem_budgets():
    """(input-stream budget, vmem_limit clamp); v7x-safe by default."""
    cap = 64 * 2**20
    try:
        cap = int(pltpu.get_tpu_info().vmem_capacity_bytes)
    except Exception:
        pass                                       # conservative fallback
    if cap >= 100 * 2**20:                         # v5e / v6e: 128 MiB VMEM
        return 64 * 2**20, 96 * 2**20
    return 28 * 2**20, 44 * 2**20                  # v7x: 64 MiB per TensorCore


def _choose_batch_tile(batch, max_tile=256):
    # Multiples of 8 (sublane rule for the (Bt, D) outputs).  Keep >= 2 batch
    # blocks when possible so the "parallel" axis can use both v7x cores.
    if batch >= 16:
        max_tile = min(max_tile, max(8, (batch // 2) // 8 * 8))
    cands = [t for t in range(8, min(max_tile, batch) + 1, 8) if batch % t == 0]
    return max(cands) if cands else batch


def _choose_hw_tile(hw, rows_pad, itemsize, budget_bytes, max_tile=8192):
    # Real resident bytes = padded rows x lane-padded hw_tile, double-buffered.
    per_lane = 2 * rows_pad * itemsize
    cap = (budget_bytes // per_lane) // 128 * 128
    cap = int(max(128, min(cap, max_tile)))
    if _round_up(hw, 128) <= cap:
        return hw                      # single full-extent block: no masking
    return cap


# ----------------------------------------------------------------------------
# Forward pass
# ----------------------------------------------------------------------------
@functools.partial(jax.jit, static_argnames=("hw_tile_override",))
def deepfake_detector_forward(x, params, hw_tile_override=None):
    B, C, H, W = x.shape
    D = params['w_tcm'].shape[0]
    hidden = params['w_c1'].shape[1]
    HW = H * W
    itemsize = 4                                    # frames streamed as f32

    b_tile = _choose_batch_tile(B)
    nb = B // b_tile
    rt = b_tile * C                                 # frame rows per batch block
    rt_pad = _round_up(rt, 8)

    in_budget, vmem_clamp = _vmem_budgets()
    if hw_tile_override is not None:
        hw_tile = min(int(hw_tile_override), HW)
        if hw_tile < HW:
            hw_tile = max(128, hw_tile // 128 * 128)
    else:
        hw_tile = _choose_hw_tile(HW, rt_pad, itemsize, in_budget)
    nk = pl.cdiv(HW, hw_tile)
    ragged = (HW % hw_tile) != 0

    # (B, C, H, W) -> (B*C, HW): a pure, copy-free reshape. No cast, no pad.
    x_flat = x.reshape(B * C, HW)

    # Per-row replicated w_dama (1/HW mean factor folded in) + the (Bt, RT)
    # group-sum selector used to fold channels back per batch row on the MXU.
    w_rep = jnp.tile(params['w_dama'], (b_tile, 1)) * (1.0 / float(HW))
    row_group = jnp.arange(rt, dtype=jnp.int32) // C
    sel = (row_group[None, :] ==
           jnp.arange(b_tile, dtype=jnp.int32)[:, None]).astype(jnp.float32)

    # Pack the tiny-N head weights into one lane-dense MXU operand.
    ncat = _round_up(D + 3, 128)
    wcat = jnp.zeros((D, ncat), jnp.float32)
    wcat = wcat.at[:, :D].set(params['w_tcm'])
    wcat = wcat.at[:, D:D + 1].set(params['w_inc'])
    wcat = wcat.at[:, D + 1:D + 3].set(params['w_gate'][:D, :])
    bcat = jnp.zeros((1, ncat), jnp.float32)
    bcat = bcat.at[:, :D].set(params['b_tcm'])
    bcat = bcat.at[:, D:D + 1].set(params['b_inc'])
    bcat = bcat.at[:, D + 1:D + 3].set(params['b_gate'])
    wg_t = params['w_gate'][D:, :]                       # (D, 2) tcm-half gate

    kernel = functools.partial(_fused_kernel, dama_dim=D, hw_total=HW,
                               hw_tile=hw_tile, ragged=ragged)

    const = lambda b, k: (0, 0)
    in_specs = [
        pl.BlockSpec((rt, hw_tile), lambda b, k: (b, k)),  # frames (B*C, HW)
        pl.BlockSpec((b_tile, rt), const),      # sel (group-sum selector)
        pl.BlockSpec((rt, D), const),           # w_dama replicated (incl 1/HW)
        pl.BlockSpec((1, D), const),            # b_dama
        pl.BlockSpec((D, ncat), const),         # packed [w_tcm|w_inc|w_gate_d]
        pl.BlockSpec((1, ncat), const),         # packed biases
        pl.BlockSpec((D, 2), const),            # w_gate (tcm half)
        pl.BlockSpec((D, hidden), const),       # classifier w1
        pl.BlockSpec((1, hidden), const),       # classifier b1
        pl.BlockSpec((hidden, 2), const),       # classifier w2
        pl.BlockSpec((1, 2), const),            # classifier b2
    ]
    out_specs = (
        pl.BlockSpec((b_tile, D), lambda b, k: (b, 0)),     # dama_feats
        pl.BlockSpec((b_tile, D), lambda b, k: (b, 0)),     # tcm_feats
        pl.BlockSpec((b_tile, 128), lambda b, k: (b, 0)),   # packed misc slab
    )
    out_shapes = (
        jax.ShapeDtypeStruct((B, D), jnp.float32),
        jax.ShapeDtypeStruct((B, D), jnp.float32),
        jax.ShapeDtypeStruct((B, 128), jnp.float32),
    )

    # VMEM accounting with *padded* tiles (sublanes to 8, lanes to 128).
    tile_bytes = lambda r, c: _round_up(r, 8) * _round_up(c, 128) * 4
    in_bytes = 2 * tile_bytes(rt, hw_tile)          # double-buffered frames
    w_bytes = 2 * (tile_bytes(b_tile, rt) + tile_bytes(rt, D) + tile_bytes(1, D)
                   + tile_bytes(D, ncat) + tile_bytes(1, ncat) + tile_bytes(D, 2)
                   + tile_bytes(D, hidden) + tile_bytes(1, hidden)
                   + tile_bytes(hidden, 2) + tile_bytes(1, 2))
    out_bytes = 2 * (2 * tile_bytes(b_tile, D) + tile_bytes(b_tile, 128))
    footprint = in_bytes + w_bytes + out_bytes + tile_bytes(rt, 1)
    vmem_limit = int(min(vmem_clamp,
                         max(16 * 2**20, footprint + footprint // 4 + (2 << 20))))

    dama_feats, tcm_feats, misc = pl.pallas_call(
        kernel,
        out_shape=out_shapes,
        grid_spec=pltpu.PrefetchScalarGridSpec(
            num_scalar_prefetch=0,
            grid=(nb, nk),                        # (batch blocks, hw blocks)
            in_specs=in_specs,
            out_specs=out_specs,
            scratch_shapes=[pltpu.VMEM((rt, 1), jnp.float32)],
        ),
        compiler_params=pltpu.CompilerParams(
            dimension_semantics=("parallel", "arbitrary"),
            vmem_limit_bytes=vmem_limit,
        ),
    )(x_flat, sel, w_rep, params['b_dama'], wcat, bcat, wg_t,
      params['w_c1'], params['b_c1'], params['w_c2'], params['b_c2'])

    return {
        'logits': misc[:, 0:2],
        'dama_feats': dama_feats,
        'tcm_feats': tcm_feats,
        'tcm_inconsistency': misc[:, 2:3],
    }


# ----------------------------------------------------------------------------
# Parameter init (deterministic, synthetic weights for the stand-in branches).
# ----------------------------------------------------------------------------
def init_params(key, in_channels=3, dama_dim=128, hidden=256):
    ks = jax.random.split(key, 12)
    w = lambda k, s: 0.3 * jax.random.normal(k, s, jnp.float32)
    b = lambda k, s: 0.3 * jax.random.normal(k, s, jnp.float32)
    return {
        'w_dama': w(ks[0], (in_channels, dama_dim)), 'b_dama': b(ks[1], (1, dama_dim)),
        'w_tcm':  w(ks[2], (dama_dim, dama_dim)),    'b_tcm':  b(ks[3], (1, dama_dim)),
        'w_inc':  w(ks[4], (dama_dim, 1)),           'b_inc':  b(ks[5], (1, 1)),
        'w_gate': w(ks[6], (2 * dama_dim, 2)),       'b_gate': b(ks[7], (1, 2)),
        'w_c1':   w(ks[8], (dama_dim, hidden)),      'b_c1':   b(ks[9], (1, hidden)),
        'w_c2':   w(ks[10], (hidden, 2)),            'b_c2':   b(ks[11], (1, 2)),
    }


# ----------------------------------------------------------------------------
# Pure-JAX reference for correctness checking.
# ----------------------------------------------------------------------------
def reference_forward(x, params):
    B, C, H, W = x.shape
    pooled = jnp.mean(x.reshape(B, C, H * W), axis=-1)
    dama = jax.nn.relu(pooled @ params['w_dama'] + params['b_dama'])
    tcm = jnp.tanh(dama @ params['w_tcm'] + params['b_tcm'])
    inc = jax.nn.sigmoid(dama @ params['w_inc'] + params['b_inc'])
    gate = jax.nn.softmax(
        jnp.concatenate([dama, tcm], axis=-1) @ params['w_gate']
        + params['b_gate'], axis=-1)
    fused = gate[:, 0:1] * dama + gate[:, 1:2] * tcm
    h = jax.nn.relu(fused @ params['w_c1'] + params['b_c1'])
    logits = h @ params['w_c2'] + params['b_c2']
    return {'logits': logits, 'dama_feats': dama, 'tcm_feats': tcm,
            'tcm_inconsistency': inc}


if __name__ == "__main__":
    key = jax.random.PRNGKey(0)
    k_x, k_p, k_x2 = jax.random.split(key, 3)

    C, D = 3, 128
    params = init_params(k_p, in_channels=C, dama_dim=D)

    # Case 1: tiny batch, auto tiling (single full-extent hw block, nk == 1).
    x1 = jax.random.normal(k_x, (2, C, 56, 56), jnp.float32)
    out1 = deepfake_detector_forward(x1, params)
    # Case 2: same input, forced hw tiling with a ragged tail (mask path).
    out2 = deepfake_detector_forward(x1, params, hw_tile_override=512)
    # Case 3: batch tiling (nb = 2, b_tile = 8) + multi-step even reduction.
    x3 = jax.random.normal(k_x2, (16, C, 32, 32), jnp.float32)
    out3 = deepfake_detector_forward(x3, params, hw_tile_override=256)

    jax.block_until_ready((out1, out2, out3))

    for x, out in ((x1, out1), (x1, out2), (x3, out3)):
        ref = reference_forward(x, params)
        for name in ('logits', 'dama_feats', 'tcm_feats', 'tcm_inconsistency'):
            assert out[name].shape == ref[name].shape, name
            assert bool(jnp.all(jnp.isfinite(out[name]))), name
            assert bool(jnp.allclose(out[name], ref[name],
                                     rtol=5e-2, atol=2e-2)), name

    assert out1['logits'].shape == (2, 2)
    assert out1['dama_feats'].shape == (2, D)
    assert out1['tcm_feats'].shape == (2, D)
    assert out1['tcm_inconsistency'].shape == (2, 1)
    print("KERNEL_OK")
</pallas_src>

<mosaic_0001>
module attributes {stable_mosaic.version = 11 : i64} {
  func.func @_fused_kernel(%arg0: i32, %arg1: i32, %arg2: memref<6x3136xf32, #tpu.memory_space<vmem>>, %arg3: memref<2x6xf32, #tpu.memory_space<vmem>>, %arg4: memref<6x128xf32, #tpu.memory_space<vmem>>, %arg5: memref<1x128xf32, #tpu.memory_space<vmem>>, %arg6: memref<128x256xf32, #tpu.memory_space<vmem>>, %arg7: memref<1x256xf32, #tpu.memory_space<vmem>>, %arg8: memref<128x2xf32, #tpu.memory_space<vmem>>, %arg9: memref<128x256xf32, #tpu.memory_space<vmem>>, %arg10: memref<1x256xf32, #tpu.memory_space<vmem>>, %arg11: memref<256x2xf32, #tpu.memory_space<vmem>>, %arg12: memref<1x2xf32, #tpu.memory_space<vmem>>, %arg13: memref<2x128xf32, #tpu.memory_space<vmem>>, %arg14: memref<2x128xf32, #tpu.memory_space<vmem>>, %arg15: memref<2x128xf32, #tpu.memory_space<vmem>>, %arg16: memref<6x1xf32, #tpu.memory_space<vmem>>) attributes {dimension_semantics = [#tpu.dimension_semantics<parallel>, #tpu.dimension_semantics<arbitrary>], iteration_bounds = array<i64: 1, 1>, scalar_prefetch = 0 : i64, scratch_operands = 1 : i64, tpu.core_type = #tpu.core_type<tc>, window_params = [{transform_indices = @transform_0, window_bounds = array<i64: 6, 3136>}, {pipeline_mode = #tpu.pipeline_mode<synchronous>, transform_indices = @transform_1, window_bounds = array<i64: 2, 6>}, {pipeline_mode = #tpu.pipeline_mode<synchronous>, transform_indices = @transform_2, window_bounds = array<i64: 6, 128>}, {pipeline_mode = #tpu.pipeline_mode<synchronous>, transform_indices = @transform_3, window_bounds = array<i64: 1, 128>}, {pipeline_mode = #tpu.pipeline_mode<synchronous>, transform_indices = @transform_4, window_bounds = array<i64: 128, 256>}, {pipeline_mode = #tpu.pipeline_mode<synchronous>, transform_indices = @transform_5, window_bounds = array<i64: 1, 256>}, {pipeline_mode = #tpu.pipeline_mode<synchronous>, transform_indices = @transform_6, window_bounds = array<i64: 128, 2>}, {pipeline_mode = #tpu.pipeline_mode<synchronous>, transform_indices = @transform_7, window_bounds = array<i64: 128, 256>}, {pipeline_mode = #tpu.pipeline_mode<synchronous>, transform_indices = @transform_8, window_bounds = array<i64: 1, 256>}, {pipeline_mode = #tpu.pipeline_mode<synchronous>, transform_indices = @transform_9, window_bounds = array<i64: 256, 2>}, {pipeline_mode = #tpu.pipeline_mode<synchronous>, transform_indices = @transform_10, window_bounds = array<i64: 1, 2>}, {transform_indices = @transform_11, window_bounds = array<i64: 2, 128>}, {transform_indices = @transform_12, window_bounds = array<i64: 2, 128>}, {transform_indices = @transform_13, window_bounds = array<i64: 2, 128>}]} {
    %c0_i32 = arith.constant 0 : i32
    %0 = arith.cmpi eq, %arg1, %c0_i32 : i32
    %1 = arith.extui %0 : i1 to i32
    %c0_i32_0 = arith.constant 0 : i32
    %2 = arith.cmpi ne, %1, %c0_i32_0 : i32
    scf.if %2 {
      %cst_8 = arith.constant 0.000000e+00 : f32
      %12 = vector.broadcast %cst_8 : f32 to vector<6x1xf32>
      %c0_9 = arith.constant 0 : index
      %c0_10 = arith.constant 0 : index
      %13 = vector.load %arg16[%c0_9, %c0_10] : memref<6x1xf32, #tpu.memory_space<vmem>>, vector<6x1xf32>
      tpu.vector_store %arg16[%c0_9, %c0_10], %12 {strides = array<i32>} : memref<6x1xf32, #tpu.memory_space<vmem>>, vector<6x1xf32>,
    } else {
    }
    %c0 = arith.constant 0 : index
    %c0_1 = arith.constant 0 : index
    %3 = vector.load %arg2[%c0, %c0_1] : memref<6x3136xf32, #tpu.memory_space<vmem>>, vector<6x3136xf32>
    %c0_2 = arith.constant 0 : index
    %c0_3 = arith.constant 0 : index
    %4 = vector.load %arg16[%c0_2, %c0_3] : memref<6x1xf32, #tpu.memory_space<vmem>>, vector<6x1xf32>
    %cst = arith.constant dense<0.000000e+00> : vector<6xf32>
    %5 = vector.multi_reduction <add>, %3, %cst [1] : vector<6x3136xf32> to vector<6xf32>
    %6 = vector.shape_cast %5 : vector<6xf32> to vector<6x1xf32>
    %7 = arith.addf %4, %6 : vector<6x1xf32>
    %c0_4 = arith.constant 0 : index
    %c0_5 = arith.constant 0 : index
    %8 = vector.load %arg16[%c0_4, %c0_5] : memref<6x1xf32, #tpu.memory_space<vmem>>, vector<6x1xf32>
    tpu.vector_store %arg16[%c0_4, %c0_5], %7 {strides = array<i32>} : memref<6x1xf32, #tpu.memory_space<vmem>>, vector<6x1xf32>,
    %c0_i32_6 = arith.constant 0 : i32
    %9 = arith.cmpi eq, %arg1, %c0_i32_6 : i32
    %10 = arith.extui %9 : i1 to i32
    %c0_i32_7 = arith.constant 0 : i32
    %11 = arith.cmpi ne, %10, %c0_i32_7 : i32
    scf.if %11 {
      %c0_8 = arith.constant 0 : index
      %c0_9 = arith.constant 0 : index
      %12 = vector.load %arg16[%c0_8, %c0_9] : memref<6x1xf32, #tpu.memory_space<vmem>>, vector<6x1xf32>
      %c0_10 = arith.constant 0 : index
      %c0_11 = arith.constant 0 : index
      %13 = vector.load %arg4[%c0_10, %c0_11] : memref<6x128xf32, #tpu.memory_space<vmem>>, vector<6x128xf32>
      %14 = vector.broadcast %12 : vector<6x1xf32> to vector<6x128xf32>
      %15 = arith.mulf %14, %13 : vector<6x128xf32>
      %c0_12 = arith.constant 0 : index
      %c0_13 = arith.constant 0 : index
      %16 = vector.load %arg3[%c0_12, %c0_13] : memref<2x6xf32, #tpu.memory_space<vmem>>, vector<2x6xf32>
      %cst_14 = arith.constant dense<0.000000e+00> : vector<2x128xf32>
      %17 = tpu.matmul %16, %15, %cst_14 {dimension_numbers = #tpu.dot_dimension_numbers<[1], [0], [0], [1], [0, 0, 1, 1], [], []>} : vector<2x6xf32>, vector<6x128xf32>, vector<2x128xf32> -> vector<2x128xf32>
      %c0_15 = arith.constant 0 : index
      %c0_16 = arith.constant 0 : index
      %18 = vector.load %arg5[%c0_15, %c0_16] : memref<1x128xf32, #tpu.memory_space<vmem>>, vector<1x128xf32>
      %19 = vector.broadcast %18 : vector<1x128xf32> to vector<2x128xf32>
      %20 = arith.addf %17, %19 : vector<2x128xf32>
      %cst_17 = arith.constant 0.000000e+00 : f32
      %21 = vector.broadcast %cst_17 : f32 to vector<2x128xf32>
      %22 = arith.maximumf %20, %21 : vector<2x128xf32>
      %c0_18 = arith.constant 0 : index
      %c0_19 = arith.constant 0 : index
      %23 = vector.load %arg6[%c0_18, %c0_19] : memref<128x256xf32, #tpu.memory_space<vmem>>, vector<128x256xf32>
      %cst_20 = arith.constant dense<0.000000e+00> : vector<2x256xf32>
      %24 = tpu.matmul %22, %23, %cst_20 {dimension_numbers = #tpu.dot_dimension_numbers<[1], [0], [0], [1], [0, 0, 1, 1], [], []>} : vector<2x128xf32>, vector<128x256xf32>, vector<2x256xf32> -> vector<2x256xf32>
      %c0_21 = arith.constant 0 : index
      %c0_22 = arith.constant 0 : index
      %25 = vector.load %arg7[%c0_21, %c0_22] : memref<1x256xf32, #tpu.memory_space<vmem>>, vector<1x256xf32>
      %26 = vector.broadcast %25 : vector<1x256xf32> to vector<2x256xf32>
      %27 = arith.addf %24, %26 : vector<2x256xf32>
      %28 = vector.extract_strided_slice %27 {offsets = [0, 0], sizes = [2, 128], strides = [1, 1]} : vector<2x256xf32> to vector<2x128xf32>
      %29 = math.tanh %28 : vector<2x128xf32>
      %30 = vector.extract_strided_slice %27 {offsets = [0, 128], sizes = [2, 1], strides = [1, 1]} : vector<2x256xf32> to vector<2x1xf32>
      %cst_23 = arith.constant 0.000000e+00 : f32
      %31 = vector.broadcast %cst_23 : f32 to vector<2x1xf32>
      %32 = arith.subf %31, %30 : vector<2x1xf32>
      %33 = math.exp %32 : vector<2x1xf32>
      %cst_24 = arith.constant 1.000000e+00 : f32
      %34 = vector.broadcast %cst_24 : f32 to vector<2x1xf32>
      %35 = arith.addf %34, %33 : vector<2x1xf32>
      %cst_25 = arith.constant 1.000000e+00 : f32
      %36 = vector.broadcast %cst_25 : f32 to vector<2x1xf32>
      %37 = arith.divf %36, %35 : vector<2x1xf32>
      %38 = vector.extract_strided_slice %27 {offsets = [0, 129], sizes = [2, 2], strides = [1, 1]} : vector<2x256xf32> to vector<2x2xf32>
      %c0_26 = arith.constant 0 : index
      %c0_27 = arith.constant 0 : index
      %39 = vector.load %arg8[%c0_26, %c0_27] : memref<128x2xf32, #tpu.memory_space<vmem>>, vector<128x2xf32>
      %cst_28 = arith.constant dense<0.000000e+00> : vector<2x2xf32>
      %40 = tpu.matmul %29, %39, %cst_28 {dimension_numbers = #tpu.dot_dimension_numbers<[1], [0], [0], [1], [0, 0, 1, 1], [], []>} : vector<2x128xf32>, vector<128x2xf32>, vector<2x2xf32> -> vector<2x2xf32>
      %41 = arith.addf %38, %40 : vector<2x2xf32>
      %42 = vector.extract_strided_slice %41 {offsets = [0, 0], sizes = [2, 1], strides = [1, 1]} : vector<2x2xf32> to vector<2x1xf32>
      %43 = vector.extract_strided_slice %41 {offsets = [0, 1], sizes = [2, 1], strides = [1, 1]} : vector<2x2xf32> to vector<2x1xf32>
      %44 = arith.subf %42, %43 : vector<2x1xf32>
      %cst_29 = arith.constant 0.000000e+00 : f32
      %45 = vector.broadcast %cst_29 : f32 to vector<2x1xf32>
      %46 = arith.subf %45, %44 : vector<2x1xf32>
      %47 = math.exp %46 : vector<2x1xf32>
      %cst_30 = arith.constant 1.000000e+00 : f32
      %48 = vector.broadcast %cst_30 : f32 to vector<2x1xf32>
      %49 = arith.addf %48, %47 : vector<2x1xf32>
      %cst_31 = arith.constant 1.000000e+00 : f32
      %50 = vector.broadcast %cst_31 : f32 to vector<2x1xf32>
      %51 = arith.divf %50, %49 : vector<2x1xf32>
      %cst_32 = arith.constant 1.000000e+00 : f32
      %52 = vector.broadcast %cst_32 : f32 to vector<2x1xf32>
      %53 = arith.subf %52, %51 : vector<2x1xf32>
      %54 = vector.broadcast %51 : vector<2x1xf32> to vector<2x128xf32>
      %55 = arith.mulf %54, %22 : vector<2x128xf32>
      %56 = vector.broadcast %53 : vector<2x1xf32> to vector<2x128xf32>
      %57 = arith.mulf %56, %29 : vector<2x128xf32>
      %58 = arith.addf %55, %57 : vector<2x128xf32>
      %c0_33 = arith.constant 0 : index
      %c0_34 = arith.constant 0 : index
      %59 = vector.load %arg9[%c0_33, %c0_34] : memref<128x256xf32, #tpu.memory_space<vmem>>, vector<128x256xf32>
      %cst_35 = arith.constant dense<0.000000e+00> : vector<2x256xf32>
      %60 = tpu.matmul %58, %59, %cst_35 {dimension_numbers = #tpu.dot_dimension_numbers<[1], [0], [0], [1], [0, 0, 1, 1], [], []>} : vector<2x128xf32>, vector<128x256xf32>, vector<2x256xf32> -> vector<2x256xf32>
      %c0_36 = arith.constant 0 : index
      %c0_37 = arith.constant 0 : index
      %61 = vector.load %arg10[%c0_36, %c0_37] : memref<1x256xf32, #tpu.memory_space<vmem>>, vector<1x256xf32>
      %62 = vector.broadcast %61 : vector<1x256xf32> to vector<2x256xf32>
      %63 = arith.addf %60, %62 : vector<2x256xf32>
      %cst_38 = arith.constant 0.000000e+00 : f32
      %64 = vector.broadcast %cst_38 : f32 to vector<2x256xf32>
      %65 = arith.maximumf %63, %64 : vector<2x256xf32>
      %c0_39 = arith.constant 0 : index
      %c0_40 = arith.constant 0 : index
      %66 = vector.load %arg11[%c0_39, %c0_40] : memref<256x2xf32, #tpu.memory_space<vmem>>, vector<256x2xf32>
      %cst_41 = arith.constant dense<0.000000e+00> : vector<2x2xf32>
      %67 = tpu.matmul %65, %66, %cst_41 {dimension_numbers = #tpu.dot_dimension_numbers<[1], [0], [0], [1], [0, 0, 1, 1], [], []>} : vector<2x256xf32>, vector<256x2xf32>, vector<2x2xf32> -> vector<2x2xf32>
      %c0_42 = arith.constant 0 : index
      %c0_43 = arith.constant 0 : index
      %68 = vector.load %arg12[%c0_42, %c0_43] : memref<1x2xf32, #tpu.memory_space<vmem>>, vector<1x2xf32>
      %69 = vector.broadcast %68 : vector<1x2xf32> to vector<2x2xf32>
      %70 = arith.addf %67, %69 : vector<2x2xf32>
      %c0_44 = arith.constant 0 : index
      %c0_45 = arith.constant 0 : index
      %71 = vector.load %arg13[%c0_44, %c0_45] : memref<2x128xf32, #tpu.memory_space<vmem>>, vector<2x128xf32>
      tpu.vector_store %arg13[%c0_44, %c0_45], %22 {strides = array<i32>} : memref<2x128xf32, #tpu.memory_space<vmem>>, vector<2x128xf32>,
      %c0_46 = arith.constant 0 : index
      %c0_47 = arith.constant 0 : index
      %72 = vector.load %arg14[%c0_46, %c0_47] : memref<2x128xf32, #tpu.memory_space<vmem>>, vector<2x128xf32>
      tpu.vector_store %arg14[%c0_46, %c0_47], %29 {strides = array<i32>} : memref<2x128xf32, #tpu.memory_space<vmem>>, vector<2x128xf32>,
      %cst_48 = arith.constant 0.000000e+00 : f32
      %73 = vector.broadcast %cst_48 : f32 to vector<2x125xf32>
      %74 = tpu.concatenate %70, %37, %73 in 1 : vector<2x2xf32>, vector<2x1xf32>, vector<2x125xf32> -> vector<2x128xf32>
      %c0_49 = arith.constant 0 : index
      %c0_50 = arith.constant 0 : index
      %75 = vector.load %arg15[%c0_49, %c0_50] : memref<2x128xf32, #tpu.memory_space<vmem>>, vector<2x128xf32>
      tpu.vector_store %arg15[%c0_49, %c0_50], %74 {strides = array<i32>} : memref<2x128xf32, #tpu.memory_space<vmem>>, vector<2x128xf32>,
    } else {
    }
    return
  }
  func.func @transform_0(%arg0: i32, %arg1: i32) -> (i32, i32) {
    %c0_i32 = arith.constant 0 : i32
    return %arg0, %arg1 : i32, i32
  }
  func.func @transform_1(%arg0: i32, %arg1: i32) -> (i32, i32) {
    %c0_i32 = arith.constant 0 : i32
    %c0_i32_0 = arith.constant 0 : i32
    %c0_i32_1 = arith.constant 0 : i32
    return %c0_i32, %c0_i32_0 : i32, i32
  }
  func.func @transform_2(%arg0: i32, %arg1: i32) -> (i32, i32) {
    %c0_i32 = arith.constant 0 : i32
    %c0_i32_0 = arith.constant 0 : i32
    %c0_i32_1 = arith.constant 0 : i32
    return %c0_i32, %c0_i32_0 : i32, i32
  }
  func.func @transform_3(%arg0: i32, %arg1: i32) -> (i32, i32) {
    %c0_i32 = arith.constant 0 : i32
    %c0_i32_0 = arith.constant 0 : i32
    %c0_i32_1 = arith.constant 0 : i32
    return %c0_i32, %c0_i32_0 : i32, i32
  }
  func.func @transform_4(%arg0: i32, %arg1: i32) -> (i32, i32) {
    %c0_i32 = arith.constant 0 : i32
    %c0_i32_0 = arith.constant 0 : i32
    %c0_i32_1 = arith.constant 0 : i32
    return %c0_i32, %c0_i32_0 : i32, i32
  }
  func.func @transform_5(%arg0: i32, %arg1: i32) -> (i32, i32) {
    %c0_i32 = arith.constant 0 : i32
    %c0_i32_0 = arith.constant 0 : i32
    %c0_i32_1 = arith.constant 0 : i32
    return %c0_i32, %c0_i32_0 : i32, i32
  }
  func.func @transform_6(%arg0: i32, %arg1: i32) -> (i32, i32) {
    %c0_i32 = arith.constant 0 : i32
    %c0_i32_0 = arith.constant 0 : i32
    %c0_i32_1 = arith.constant 0 : i32
    return %c0_i32, %c0_i32_0 : i32, i32
  }
  func.func @transform_7(%arg0: i32, %arg1: i32) -> (i32, i32) {
    %c0_i32 = arith.constant 0 : i32
    %c0_i32_0 = arith.constant 0 : i32
    %c0_i32_1 = arith.constant 0 : i32
    return %c0_i32, %c0_i32_0 : i32, i32
  }
  func.func @transform_8(%arg0: i32, %arg1: i32) -> (i32, i32) {
    %c0_i32 = arith.constant 0 : i32
    %c0_i32_0 = arith.constant 0 : i32
    %c0_i32_1 = arith.constant 0 : i32
    return %c0_i32, %c0_i32_0 : i32, i32
  }
  func.func @transform_9(%arg0: i32, %arg1: i32) -> (i32, i32) {
    %c0_i32 = arith.constant 0 : i32
    %c0_i32_0 = arith.constant 0 : i32
    %c0_i32_1 = arith.constant 0 : i32
    return %c0_i32, %c0_i32_0 : i32, i32
  }
  func.func @transform_10(%arg0: i32, %arg1: i32) -> (i32, i32) {
    %c0_i32 = arith.constant 0 : i32
    %c0_i32_0 = arith.constant 0 : i32
    %c0_i32_1 = arith.constant 0 : i32
    return %c0_i32, %c0_i32_0 : i32, i32
  }
  func.func @transform_11(%arg0: i32, %arg1: i32) -> (i32, i32) {
    %c0_i32 = arith.constant 0 : i32
    %c0_i32_0 = arith.constant 0 : i32
    return %arg0, %c0_i32 : i32, i32
  }
  func.func @transform_12(%arg0: i32, %arg1: i32) -> (i32, i32) {
    %c0_i32 = arith.constant 0 : i32
    %c0_i32_0 = arith.constant 0 : i32
    return %arg0, %c0_i32 : i32, i32
  }
  func.func @transform_13(%arg0: i32, %arg1: i32) -> (i32, i32) {
    %c0_i32 = arith.constant 0 : i32
    %c0_i32_0 = arith.constant 0 : i32
    return %arg0, %c0_i32 : i32, i32
  }
}

</mosaic_0001>

<llo_original>
// kernel: deepfake_detector_forward.1
$region0: #{deepfake_detector_forward.1}
  #allocation0 [shape = 'u32[]', space=smem, size = 0x4, offset = 0x4, fixed_abs, tag = 'smem constant byte address 0x4 - core index']
  #allocation1 [shape = 'u32[72,128]{1,0:T(1,128)}', space=vmem, size = 0x9000, scoped, tag = 'internal scratch']
  #allocation2 [shape = 'f32[6,1]{1,0:T(8,128)}', space=vmem, size = 0x1000, scoped, tag = 'scratch operand']
  %s0 = inlined_call_operand.vmem [shape: f32[6,3136], index: 0, kind: input, shape index: {}]
  %s1 = inlined_call_operand.vmem [shape: f32[2,6], index: 1, kind: input, shape index: {}]
  %s2 = inlined_call_operand.vmem [shape: f32[6,128], index: 2, kind: input, shape index: {}]
  %s3 = inlined_call_operand.vmem [shape: f32[1,128], index: 3, kind: input, shape index: {}]
  %s4 = inlined_call_operand.vmem [shape: f32[128,256], index: 4, kind: input, shape index: {}]
  %s5 = inlined_call_operand.vmem [shape: f32[1,256], index: 5, kind: input, shape index: {}]
  %s6 = inlined_call_operand.vmem [shape: f32[128,2], index: 6, kind: input, shape index: {}]
  %s7 = inlined_call_operand.vmem [shape: f32[128,256], index: 7, kind: input, shape index: {}]
  %s8 = inlined_call_operand.vmem [shape: f32[1,256], index: 8, kind: input, shape index: {}]
  %s9 = inlined_call_operand.vmem [shape: f32[256,2], index: 9, kind: input, shape index: {}]
  %s10 = inlined_call_operand.vmem [shape: f32[1,2], index: 10, kind: input, shape index: {}]
  %s11 = inlined_call_operand.hbm [shape: f32[2,128], index: 11, kind: output, shape index: {0}]
  %s12 = inlined_call_operand.hbm [shape: f32[2,128], index: 12, kind: output, shape index: {1}]
  %s13 = inlined_call_operand.vmem [shape: f32[2,128], index: 13, kind: output, shape index: {2}]
  %14 = xla_tuple %s11, %s12, %s13
  %s15 = sld [smem:[#allocation0]]
  $region78: #{deepfake_detector_forward.1} parent=0
    _
  %s17 = ssub.s32 1, %s15
  %s18 = scalar_select 0, %s17, %s15
  $region1: #{deepfake_detector_forward.1} parent=0
    #allocation3 [shape = 'u8[1024]{0}', space=vmem, size = 0x400, scoped, tag = 'output window, operand 0, single buffered']
    #allocation4 [shape = 's32[1]{0}', space=sflag, size = 0x4, scoped, tag = 'scoped memory for deepfake_detector_forward.1']
    #allocation5 [shape = 'u8[1024]{0}', space=vmem, size = 0x400, scoped, tag = 'output window, operand 1, single buffered']
    #allocation6 [shape = 's32[1]{0}', space=sflag, size = 0x4, scoped, tag = 'scoped memory for deepfake_detector_forward.1']
    %19 = vsyncpa [#allocation4], 0
    %20 = vsyncpa [#allocation6], 0
    // Predicated region
    $region2: #{deepfake_detector_forward.1} parent=1 // pred_check
      _
    $region3: #{deepfake_detector_forward.1} parent=1 // pred_check_branch
      %22 = sbr.rel (0) target = $region5
    $region4: #{deepfake_detector_forward.1} parent=1 // pred_region
      _
    $region5: #{deepfake_detector_forward.1} parent=1 // pred_fallthru
      _
    // Predicated region
    $region6: #{deepfake_detector_forward.1} parent=1 // pred_check
      _
    $region7: #{deepfake_detector_forward.1} parent=1 // pred_check_branch
      %24 = sbr.rel (0) target = $region9
    $region8: #{deepfake_detector_forward.1} parent=1 // pred_region
      _
    $region9: #{deepfake_detector_forward.1} parent=1 // pred_fallthru
      _
    // Predicated region
    $region10: #{deepfake_detector_forward.1} parent=1 // pred_check
      _
    $region11: #{deepfake_detector_forward.1} parent=1 // pred_check_branch
      %26 = sbr.rel (0) target = $region13
    $region12: #{deepfake_detector_forward.1} parent=1 // pred_region
      _
    $region13: #{deepfake_detector_forward.1} parent=1 // pred_fallthru
      _
    // Predicated region
    $region14: #{deepfake_detector_forward.1} parent=1 // pred_check
      _
    $region15: #{deepfake_detector_forward.1} parent=1 // pred_check_branch
      %28 = sbr.rel (0) target = $region17
    $region16: #{deepfake_detector_forward.1} parent=1 // pred_region
      _
    $region17: #{deepfake_detector_forward.1} parent=1 // pred_fallthru
      _
    // Predicated region
    $region18: #{deepfake_detector_forward.1} parent=1 // pred_check
      _
    $region19: #{deepfake_detector_forward.1} parent=1 // pred_check_branch
      %30 = sbr.rel (0) target = $region21
    $region20: #{deepfake_detector_forward.1} parent=1 // pred_region
      _
    $region21: #{deepfake_detector_forward.1} parent=1 // pred_fallthru
      _
    // Predicated region
    $region22: #{deepfake_detector_forward.1} parent=1 // pred_check
      _
    $region23: #{deepfake_detector_forward.1} parent=1 // pred_check_branch
      %32 = sbr.rel (0) target = $region25
    $region24: #{deepfake_detector_forward.1} parent=1 // pred_region
      _
    $region25: #{deepfake_detector_forward.1} parent=1 // pred_fallthru
      _
    // Predicated region
    $region26: #{deepfake_detector_forward.1} parent=1 // pred_check
      _
    $region27: #{deepfake_detector_forward.1} parent=1 // pred_check_branch
      %34 = sbr.rel (0) target = $region29
    $region28: #{deepfake_detector_forward.1} parent=1 // pred_region
      _
    $region29: #{deepfake_detector_forward.1} parent=1 // pred_fallthru
      _
    // Predicated region
    $region30: #{deepfake_detector_forward.1} parent=1 // pred_check
      _
    $region31: #{deepfake_detector_forward.1} parent=1 // pred_check_branch
      %36 = sbr.rel (0) target = $region33
    $region32: #{deepfake_detector_forward.1} parent=1 // pred_region
      _
    $region33: #{deepfake_detector_forward.1} parent=1 // pred_fallthru
      _
    // Predicated region
    $region34: #{deepfake_detector_forward.1} parent=1 // pred_check
      _
    $region35: #{deepfake_detector_forward.1} parent=1 // pred_check_branch
      %38 = sbr.rel (0) target = $region37
    $region36: #{deepfake_detector_forward.1} parent=1 // pred_region
      _
    $region37: #{deepfake_detector_forward.1} parent=1 // pred_fallthru
      _
    // Predicated region
    $region38: #{deepfake_detector_forward.1} parent=1 // pred_check
      _
    $region39: #{deepfake_detector_forward.1} parent=1 // pred_check_branch
      %40 = sbr.rel (0) target = $region41
    $region40: #{deepfake_detector_forward.1} parent=1 // pred_region
      _
    $region41: #{deepfake_detector_forward.1} parent=1 // pred_fallthru
      _
    // Predicated region
    $region42: #{deepfake_detector_forward.1} parent=1 // pred_check
      _
    $region43: #{deepfake_detector_forward.1} parent=1 // pred_check_branch
      %42 = sbr.rel (0) target = $region45
    $region44: #{deepfake_detector_forward.1} parent=1 // pred_region
      _
    $region45: #{deepfake_detector_forward.1} parent=1 // pred_fallthru
      _
    %p43 = scmp.eq.s32.totalorder 0, 0
    // Predicated region
    $region46: #{deepfake_detector_forward.1} parent=1 // pred_check
      %p44 = pneg %p43
    $region47: #{deepfake_detector_forward.1} parent=1 // pred_check_branch
      %46 = sbr.rel (%p44) target = $region49
    $region48: #{deepfake_detector_forward.1} parent=1 // pred_region
      %vm47 = vcmask 5120
      %48 = vst.msk [vmem:[#allocation2] sm:$0x3f] %vm47, 0.0
    $region49: #{deepfake_detector_forward.1} parent=1 // pred_fallthru
      _
    %v49 = vld [vmem:[%s0] sm:$0x3f]
    %v50 = vld [vmem:[%s0 + $0x8] sm:$0x3f]
    %v51 = vld [vmem:[%s0 + $0x10] sm:$0x3f]
    %v52 = vld [vmem:[%s0 + $0x18] sm:$0x3f]
    %v53 = vld [vmem:[%s0 + $0x20] sm:$0x3f]
    %v54 = vld [vmem:[%s0 + $0x28] sm:$0x3f]
    %v55 = vld [vmem:[%s0 + $0x30] sm:$0x3f]
    %v56 = vld [vmem:[%s0 + $0x38] sm:$0x3f]
    %v57 = vld [vmem:[%s0 + $0x40] sm:$0x3f]
    %v58 = vld [vmem:[%s0 + $0x48] sm:$0x3f]
    %v59 = vld [vmem:[%s0 + $0x50] sm:$0x3f]
    %v60 = vld [vmem:[%s0 + $0x58] sm:$0x3f]
    %v61 = vld [vmem:[%s0 + $0x60] sm:$0x3f]
    %v62 = vld [vmem:[%s0 + $0x68] sm:$0x3f]
    %v63 = vld [vmem:[%s0 + $0x70] sm:$0x3f]
    %v64 = vld [vmem:[%s0 + $0x78] sm:$0x3f]
    %v65 = vld [vmem:[%s0 + $0x80] sm:$0x3f]
    %v66 = vld [vmem:[%s0 + $0x88] sm:$0x3f]
    %v67 = vld [vmem:[%s0 + $0x90] sm:$0x3f]
    %v68 = vld [vmem:[%s0 + $0x98] sm:$0x3f]
    %v69 = vld [vmem:[%s0 + $0xa0] sm:$0x3f]
    %v70 = vld [vmem:[%s0 + $0xa8] sm:$0x3f]
    %v71 = vld [vmem:[%s0 + $0xb0] sm:$0x3f]
    %v72 = vld [vmem:[%s0 + $0xb8] sm:$0x3f]
    %v73 = vld [vmem:[%s0 + $0xc0] sm:$0x3f]
    %v74 = vld [vmem:[#allocation2] sm:$0x3f]
    %vm75 = vcmask 1045504
    %v76 = vsel %vm75, %v49, 0.0
    %v77 = vsel %vm75, %v50, 0.0
    %v78 = vadd.f32 %v76, %v77
    %v79 = vsel %vm75, %v51, 0.0
    %v80 = vadd.f32 %v78, %v79
    %v81 = vsel %vm75, %v52, 0.0
    %v82 = vadd.f32 %v80, %v81
    %v83 = vsel %vm75, %v53, 0.0
    %v84 = vadd.f32 %v82, %v83
    %v85 = vsel %vm75, %v54, 0.0
    %v86 = vadd.f32 %v84, %v85
    %v87 = vsel %vm75, %v55, 0.0
    %v88 = vadd.f32 %v86, %v87
    %v89 = vsel %vm75, %v56, 0.0
    %v90 = vadd.f32 %v88, %v89
    %v91 = vsel %vm75, %v57, 0.0
    %v92 = vadd.f32 %v90, %v91
    %v93 = vsel %vm75, %v58, 0.0
    %v94 = vadd.f32 %v92, %v93
    %v95 = vsel %vm75, %v59, 0.0
    %v96 = vadd.f32 %v94, %v95
    %v97 = vsel %vm75, %v60, 0.0
    %v98 = vadd.f32 %v96, %v97
    %v99 = vsel %vm75, %v61, 0.0
    %v100 = vadd.f32 %v98, %v99
    %v101 = vsel %vm75, %v62, 0.0
    %v102 = vadd.f32 %v100, %v101
    %v103 = vsel %vm75, %v63, 0.0
    %v104 = vadd.f32 %v102, %v103
    %v105 = vsel %vm75, %v64, 0.0
    %v106 = vadd.f32 %v104, %v105
    %v107 = vsel %vm75, %v65, 0.0
    %v108 = vadd.f32 %v106, %v107
    %v109 = vsel %vm75, %v66, 0.0
    %v110 = vadd.f32 %v108, %v109
    %v111 = vsel %vm75, %v67, 0.0
    %v112 = vadd.f32 %v110, %v111
    %v113 = vsel %vm75, %v68, 0.0
    %v114 = vadd.f32 %v112, %v113
    %v115 = vsel %vm75, %v69, 0.0
    %v116 = vadd.f32 %v114, %v115
    %v117 = vsel %vm75, %v70, 0.0
    %v118 = vadd.f32 %v116, %v117
    %v119 = vsel %vm75, %v71, 0.0
    %v120 = vadd.f32 %v118, %v119
    %v121 = vsel %vm75, %v72, 0.0
    %v122 = vadd.f32 %v120, %v121
    %vm123 = vcmask 521216
    %v124 = vsel %vm123, %v73, 0.0
    %v125 = vadd.f32 %v122, %v124
    %126 = vadd.xlane.f32.xlu0 %v125
    %v127 = vpop.xlane.xlu0 %126
    %v128 = vadd.f32 %v74, %v127
    %vm129 = vcmask 5120
    %130 = vst.msk [vmem:[#allocation2] sm:$0x3f] %vm129, %v128
    // Predicated region
    $region50: #{deepfake_detector_forward.1} parent=1 // pred_check
      %p131 = pneg %p43
    $region51: #{deepfake_detector_forward.1} parent=1 // pred_check_branch
      %133 = sbr.rel (%p131) target = $region53
    $region52: #{deepfake_detector_forward.1} parent=1 // pred_region
      %v134 = vld [vmem:[#allocation2] sm:$0x3f]
      %v135 = vld [vmem:[%s2] sm:$0x3f]
      %137 = vset.pattern.permute.xlu0 0
      %138 = vperm.xlu0 %137, %v134
      %v139 = vpop.permute.xlu0 %138
      %v141 = vmul.f32 %v139, %v135
      %v142 = vld [vmem:[%s1] sm:$0x3]
      %v143 = vld [vmem:[%s3] sm:$0x1]
      %v145 = vperm.slane %v143, 0
      %vm147 = vcmask 48128
      %v149 = vsel %vm147, %v142, 0
      %v152 = vsel %vm75, %v141, 0
      %154 = vmatpush.msra.mxu0 0.0
      %155 = vmatpush.msra.mxu0 0.0
      %156 = vmatpush.msra.mxu0 0.0
      %157 = vmatpush.msra.mxu0 0.0
      %158 = vmatpush.msra.mxu0 0.0
      %159 = vmatpush.msra.mxu0 0.0
      %160 = vmatpush.msra.mxu0 0.0
      %161 = vmatpush.msra.mxu0 0.0
      %162 = vmatpush.msra.mxu0 0.0
      %163 = vmatpush.msra.mxu0 0.0
      %164 = vmatpush.msra.mxu0 0.0
      %165 = vmatpush.msra.mxu0 0.0
      %166 = vmatpush.msra.mxu0 0.0
      %167 = vmatpush.msra.mxu0 0.0
      %168 = vmatpush.msra.mxu0 0.0
      %169 = vmatpush.msra.mxu0 %v152
      %170 = vmatmul.f32.gmra.mxu0 %v149
      %v171 = vpop.f32.mrf.mxu0
      %v172 = vadd.f32 %v145, %v171
      %173 = vdwg.mxu0
      %v174 = vmax.f32 %v172, 0.0
      %v175 = vld [vmem:[%s4] sm:$0xff]
      %v176 = vld [vmem:[%s4 + $0x8] sm:$0xff]
      %v177 = vld [vmem:[%s4 + $0x10] sm:$0xff]
      %v178 = vld [vmem:[%s4 + $0x18] sm:$0xff]
      %v179 = vld [vmem:[%s4 + $0x20] sm:$0xff]
      %v180 = vld [vmem:[%s4 + $0x28] sm:$0xff]
      %v181 = vld [vmem:[%s4 + $0x30] sm:$0xff]
      %v182 = vld [vmem:[%s4 + $0x38] sm:$0xff]
      %v183 = vld [vmem:[%s4 + $0x40] sm:$0xff]
      %v184 = vld [vmem:[%s4 + $0x48] sm:$0xff]
      %v185 = vld [vmem:[%s4 + $0x50] sm:$0xff]
      %v186 = vld [vmem:[%s4 + $0x58] sm:$0xff]
      %v187 = vld [vmem:[%s4 + $0x60] sm:$0xff]
      %v188 = vld [vmem:[%s4 + $0x68] sm:$0xff]
      %v189 = vld [vmem:[%s4 + $0x70] sm:$0xff]
      %v190 = vld [vmem:[%s4 + $0x78] sm:$0xff]
      %v191 = vld [vmem:[%s4 + $0x80] sm:$0xff]
      %v192 = vld [vmem:[%s4 + $0x88] sm:$0xff]
      %v193 = vld [vmem:[%s4 + $0x90] sm:$0xff]
      %v194 = vld [vmem:[%s4 + $0x98] sm:$0xff]
      %v195 = vld [vmem:[%s4 + $0xa0] sm:$0xff]
      %v196 = vld [vmem:[%s4 + $0xa8] sm:$0xff]
      %v197 = vld [vmem:[%s4 + $0xb0] sm:$0xff]
      %v198 = vld [vmem:[%s4 + $0xb8] sm:$0xff]
      %v199 = vld [vmem:[%s4 + $0xc0] sm:$0xff]
      %v200 = vld [vmem:[%s4 + $0xc8] sm:$0xff]
      %v201 = vld [vmem:[%s4 + $0xd0] sm:$0xff]
      %v202 = vld [vmem:[%s4 + $0xd8] sm:$0xff]
      %v203 = vld [vmem:[%s4 + $0xe0] sm:$0xff]
      %v204 = vld [vmem:[%s4 + $0xe8] sm:$0xff]
      %v205 = vld [vmem:[%s4 + $0xf0] sm:$0xff]
      %v206 = vld [vmem:[%s4 + $0xf8] sm:$0xff]
      %v207 = vld [vmem:[%s5] sm:$0x3]
      %v209 = vperm.slane %v207, 0
      %v210 = vperm.slane %v207, 1
      %213 = vmatpush.msra.mxu0 %v205
      %214 = vmatpush.msra.mxu0 %v203
      %215 = vmatpush.msra.mxu0 %v201
      %216 = vmatpush.msra.mxu0 %v199
      %217 = vmatpush.msra.mxu0 %v197
      %218 = vmatpush.msra.mxu0 %v195
      %219 = vmatpush.msra.mxu0 %v193
      %220 = vmatpush.msra.mxu0 %v191
      %221 = vmatpush.msra.mxu0 %v189
      %222 = vmatpush.msra.mxu0 %v187
      %223 = vmatpush.msra.mxu0 %v185
      %224 = vmatpush.msra.mxu0 %v183
      %225 = vmatpush.msra.mxu0 %v181
      %226 = vmatpush.msra.mxu0 %v179
      %227 = vmatpush.msra.mxu0 %v177
      %228 = vmatpush.msra.mxu0 %v175
      %229 = vmatmul.f32.gmra.mxu0 %v174
      %v230 = vpop.f32.mrf.mxu0
      %v231 = vadd.f32 %v209, %v230
      %232 = vdwg.mxu0
      %233 = vmatpush.msra.mxu0 %v206
      %234 = vmatpush.msra.mxu0 %v204
      %235 = vmatpush.msra.mxu0 %v202
      %236 = vmatpush.msra.mxu0 %v200
      %237 = vmatpush.msra.mxu0 %v198
      %238 = vmatpush.msra.mxu0 %v196
      %239 = vmatpush.msra.mxu0 %v194
      %240 = vmatpush.msra.mxu0 %v192
      %241 = vmatpush.msra.mxu0 %v190
      %242 = vmatpush.msra.mxu0 %v188
      %243 = vmatpush.msra.mxu0 %v186
      %244 = vmatpush.msra.mxu0 %v184
      %245 = vmatpush.msra.mxu0 %v182
      %246 = vmatpush.msra.mxu0 %v180
      %247 = vmatpush.msra.mxu0 %v178
      %248 = vmatpush.msra.mxu0 %v176
      %249 = vmatmul.f32.gmra.mxu0 %v174
      %v250 = vpop.f32.mrf.mxu0
      %v251 = vadd.f32 %v210, %v250
      %252 = vdwg.mxu0
      %v253 = vtanh.pop %v231
      %v254 = vsub.f32 0.0, %v251
      %v255 = vmul.f32 %v254, 1.442695
      %v256 = vpow.pop %v255
      %v257 = vadd.f32 %v256, 1.0
      %v258 = vrcp.pop %v257
      %v259 = vmul.f32 %v257, %v258
      %v260 = vsub.f32 1.0, %v259
      %v261 = vmul.f32 %v258, %v260
      %v262 = vadd.f32 %v258, %v261
      %vm263 = vweird.f32 %v257
      %vm264 = vweird.f32 %v258
      %vm265 = vmor %vm263, %vm264
      %v266 = vsel %vm265, %v258, %v262
      %v267 = vand.u32 2147483647, %v257
      %vm268 = vcmp.eq.f32.partialorder %v267, 8.507059e+37
      %v269 = vand.u32 %v257, 2147483648
      %v270 = vor.u32 1.1754944e-38, %v269
      %v271 = vsel %vm268, %v270, %v266
      %v272 = vmul.f32 1.0, %v271
      %v273 = vld [vmem:[%s6] sm:$0xff]
      %v274 = vld [vmem:[%s6 + $0x8] sm:$0xff]
      %v275 = vld [vmem:[%s6 + $0x10] sm:$0xff]
      %v276 = vld [vmem:[%s6 + $0x18] sm:$0xff]
      %v277 = vld [vmem:[%s6 + $0x20] sm:$0xff]
      %v278 = vld [vmem:[%s6 + $0x28] sm:$0xff]
      %v279 = vld [vmem:[%s6 + $0x30] sm:$0xff]
      %v280 = vld [vmem:[%s6 + $0x38] sm:$0xff]
      %v281 = vld [vmem:[%s6 + $0x40] sm:$0xff]
      %v282 = vld [vmem:[%s6 + $0x48] sm:$0xff]
      %v283 = vld [vmem:[%s6 + $0x50] sm:$0xff]
      %v284 = vld [vmem:[%s6 + $0x58] sm:$0xff]
      %v285 = vld [vmem:[%s6 + $0x60] sm:$0xff]
      %v286 = vld [vmem:[%s6 + $0x68] sm:$0xff]
      %v287 = vld [vmem:[%s6 + $0x70] sm:$0xff]
      %v288 = vld [vmem:[%s6 + $0x78] sm:$0xff]
      %289 = vmatpush.msra.mxu0 %v288
      %290 = vmatpush.msra.mxu0 %v287
      %291 = vmatpush.msra.mxu0 %v286
      %292 = vmatpush.msra.mxu0 %v285
      %293 = vmatpush.msra.mxu0 %v284
      %294 = vmatpush.msra.mxu0 %v283
      %295 = vmatpush.msra.mxu0 %v282
      %296 = vmatpush.msra.mxu0 %v281
      %297 = vmatpush.msra.mxu0 %v280
      %298 = vmatpush.msra.mxu0 %v279
      %299 = vmatpush.msra.mxu0 %v278
      %300 = vmatpush.msra.mxu0 %v277
      %301 = vmatpush.msra.mxu0 %v276
      %302 = vmatpush.msra.mxu0 %v275
      %303 = vmatpush.msra.mxu0 %v274
      %304 = vmatpush.msra.mxu0 %v273
      %305 = vmatmul.f32.gmra.mxu0 %v253
      %v306 = vpop.f32.mrf.mxu0
      %v307 = vadd.f32 0.0, %v306
      %308 = vdwg.mxu0
      %310 = vrot.lane.b32.xlu0 %v307, 1
      %v311 = vpop.permute.xlu0 %310
      %v313 = vadd.f32 %v251, %v311
      %315 = vrot.lane.b32.xlu0 %v313, 127
      %v316 = vpop.permute.xlu0 %315
      %v318 = vsub.f32 %v313, %v316
      %v319 = vsub.f32 0.0, %v318
      %v320 = vmul.f32 %v319, 1.442695
      %v321 = vpow.pop %v320
      %v322 = vadd.f32 %v321, 1.0
      %v323 = vrcp.pop %v322
      %v324 = vmul.f32 %v322, %v323
      %v325 = vsub.f32 1.0, %v324
      %v326 = vmul.f32 %v323, %v325
      %v327 = vadd.f32 %v323, %v326
      %vm328 = vweird.f32 %v322
      %vm329 = vweird.f32 %v323
      %vm330 = vmor %vm328, %vm329
      %v331 = vsel %vm330, %v323, %v327
      %v332 = vand.u32 2147483647, %v322
      %vm333 = vcmp.eq.f32.partialorder %v332, 8.507059e+37
      %v334 = vand.u32 %v322, 2147483648
      %v335 = vor.u32 1.1754944e-38, %v334
      %v336 = vsel %vm333, %v335, %v331
      %v337 = vmul.f32 1.0, %v336
      %v338 = vsub.f32 1.0, %v337
      %340 = vset.pattern.permute.xlu0 1
      %341 = vperm.xlu0 %340, %v337
      %v342 = vpop.permute.xlu0 %341
      %v344 = vmul.f32 %v342, %v174
      %346 = vset.pattern.permute.xlu0 1
      %347 = vperm.xlu0 %346, %v338
      %v348 = vpop.permute.xlu0 %347
      %v350 = vmul.f32 %v348, %v253
      %v351 = vadd.f32 %v344, %v350
      %v352 = vld [vmem:[%s7] sm:$0xff]
      %v353 = vld [vmem:[%s7 + $0x8] sm:$0xff]
      %v354 = vld [vmem:[%s7 + $0x10] sm:$0xff]
      %v355 = vld [vmem:[%s7 + $0x18] sm:$0xff]
      %v356 = vld [vmem:[%s7 + $0x20] sm:$0xff]
      %v357 = vld [vmem:[%s7 + $0x28] sm:$0xff]
      %v358 = vld [vmem:[%s7 + $0x30] sm:$0xff]
      %v359 = vld [vmem:[%s7 + $0x38] sm:$0xff]
      %v360 = vld [vmem:[%s7 + $0x40] sm:$0xff]
      %v361 = vld [vmem:[%s7 + $0x48] sm:$0xff]
      %v362 = vld [vmem:[%s7 + $0x50] sm:$0xff]
      %v363 = vld [vmem:[%s7 + $0x58] sm:$0xff]
      %v364 = vld [vmem:[%s7 + $0x60] sm:$0xff]
      %v365 = vld [vmem:[%s7 + $0x68] sm:$0xff]
      %v366 = vld [vmem:[%s7 + $0x70] sm:$0xff]
      %v367 = vld [vmem:[%s7 + $0x78] sm:$0xff]
      %v368 = vld [vmem:[%s7 + $0x80] sm:$0xff]
      %v369 = vld [vmem:[%s7 + $0x88] sm:$0xff]
      %v370 = vld [vmem:[%s7 + $0x90] sm:$0xff]
      %v371 = vld [vmem:[%s7 + $0x98] sm:$0xff]
      %v372 = vld [vmem:[%s7 + $0xa0] sm:$0xff]
      %v373 = vld [vmem:[%s7 + $0xa8] sm:$0xff]
      %v374 = vld [vmem:[%s7 + $0xb0] sm:$0xff]
      %v375 = vld [vmem:[%s7 + $0xb8] sm:$0xff]
      %v376 = vld [vmem:[%s7 + $0xc0] sm:$0xff]
      %v377 = vld [vmem:[%s7 + $0xc8] sm:$0xff]
      %v378 = vld [vmem:[%s7 + $0xd0] sm:$0xff]
      %v379 = vld [vmem:[%s7 + $0xd8] sm:$0xff]
      %v380 = vld [vmem:[%s7 + $0xe0] sm:$0xff]
      %v381 = vld [vmem:[%s7 + $0xe8] sm:$0xff]
      %v382 = vld [vmem:[%s7 + $0xf0] sm:$0xff]
      %v383 = vld [vmem:[%s7 + $0xf8] sm:$0xff]
      %v384 = vld [vmem:[%s8] sm:$0x3]
      %v386 = vperm.slane %v384, 0
      %v387 = vperm.slane %v384, 1
      %390 = vmatpush.msra.mxu0 %v382
      %391 = vmatpush.msra.mxu0 %v380
      %392 = vmatpush.msra.mxu0 %v378
      %393 = vmatpush.msra.mxu0 %v376
      %394 = vmatpush.msra.mxu0 %v374
      %395 = vmatpush.msra.mxu0 %v372
      %396 = vmatpush.msra.mxu0 %v370
      %397 = vmatpush.msra.mxu0 %v368
      %398 = vmatpush.msra.mxu0 %v366
      %399 = vmatpush.msra.mxu0 %v364
      %400 = vmatpush.msra.mxu0 %v362
      %401 = vmatpush.msra.mxu0 %v360
      %402 = vmatpush.msra.mxu0 %v358
      %403 = vmatpush.msra.mxu0 %v356
      %404 = vmatpush.msra.mxu0 %v354
      %405 = vmatpush.msra.mxu0 %v352
      %406 = vmatmul.f32.gmra.mxu0 %v351
      %v407 = vpop.f32.mrf.mxu0
      %v408 = vadd.f32 %v386, %v407
      %409 = vdwg.mxu0
      %410 = vmatpush.msra.mxu0 %v383
      %411 = vmatpush.msra.mxu0 %v381
      %412 = vmatpush.msra.mxu0 %v379
      %413 = vmatpush.msra.mxu0 %v377
      %414 = vmatpush.msra.mxu0 %v375
      %415 = vmatpush.msra.mxu0 %v373
      %416 = vmatpush.msra.mxu0 %v371
      %417 = vmatpush.msra.mxu0 %v369
      %418 = vmatpush.msra.mxu0 %v367
      %419 = vmatpush.msra.mxu0 %v365
      %420 = vmatpush.msra.mxu0 %v363
      %421 = vmatpush.msra.mxu0 %v361
      %422 = vmatpush.msra.mxu0 %v359
      %423 = vmatpush.msra.mxu0 %v357
      %424 = vmatpush.msra.mxu0 %v355
      %425 = vmatpush.msra.mxu0 %v353
      %426 = vmatmul.f32.gmra.mxu0 %v351
      %v427 = vpop.f32.mrf.mxu0
      %v428 = vadd.f32 %v387, %v427
      %429 = vdwg.mxu0
      %v430 = vmax.f32 %v408, 0.0
      %v431 = vmax.f32 %v428, 0.0
      %v432 = vld [vmem:[%s9] sm:$0xff]
      %v433 = vld [vmem:[%s9 + $0x8] sm:$0xff]
      %v434 = vld [vmem:[%s9 + $0x10] sm:$0xff]
      %v435 = vld [vmem:[%s9 + $0x18] sm:$0xff]
      %v436 = vld [vmem:[%s9 + $0x20] sm:$0xff]
      %v437 = vld [vmem:[%s9 + $0x28] sm:$0xff]
      %v438 = vld [vmem:[%s9 + $0x30] sm:$0xff]
      %v439 = vld [vmem:[%s9 + $0x38] sm:$0xff]
      %v440 = vld [vmem:[%s9 + $0x40] sm:$0xff]
      %v441 = vld [vmem:[%s9 + $0x48] sm:$0xff]
      %v442 = vld [vmem:[%s9 + $0x50] sm:$0xff]
      %v443 = vld [vmem:[%s9 + $0x58] sm:$0xff]
      %v444 = vld [vmem:[%s9 + $0x60] sm:$0xff]
      %v445 = vld [vmem:[%s9 + $0x68] sm:$0xff]
      %v446 = vld [vmem:[%s9 + $0x70] sm:$0xff]
      %v447 = vld [vmem:[%s9 + $0x78] sm:$0xff]
      %v448 = vld [vmem:[%s9 + $0x80] sm:$0xff]
      %v449 = vld [vmem:[%s9 + $0x88] sm:$0xff]
      %v450 = vld [vmem:[%s9 + $0x90] sm:$0xff]
      %v451 = vld [vmem:[%s9 + $0x98] sm:$0xff]
      %v452 = vld [vmem:[%s9 + $0xa0] sm:$0xff]
      %v453 = vld [vmem:[%s9 + $0xa8] sm:$0xff]
      %v454 = vld [vmem:[%s9 + $0xb0] sm:$0xff]
      %v455 = vld [vmem:[%s9 + $0xb8] sm:$0xff]
      %v456 = vld [vmem:[%s9 + $0xc0] sm:$0xff]
      %v457 = vld [vmem:[%s9 + $0xc8] sm:$0xff]
      %v458 = vld [vmem:[%s9 + $0xd0] sm:$0xff]
      %v459 = vld [vmem:[%s9 + $0xd8] sm:$0xff]
      %v460 = vld [vmem:[%s9 + $0xe0] sm:$0xff]
      %v461 = vld [vmem:[%s9 + $0xe8] sm:$0xff]
      %v462 = vld [vmem:[%s9 + $0xf0] sm:$0xff]
      %v463 = vld [vmem:[%s9 + $0xf8] sm:$0xff]
      %v464 = vld [vmem:[%s10] sm:$0x1]
      %v466 = vperm.slane %v464, 0
      %468 = vmatpush.msra.mxu0 %v447
      %469 = vmatpush.msra.mxu0 %v446
      %470 = vmatpush.msra.mxu0 %v445
      %471 = vmatpush.msra.mxu0 %v444
      %472 = vmatpush.msra.mxu0 %v443
      %473 = vmatpush.msra.mxu0 %v442
      %474 = vmatpush.msra.mxu0 %v441
      %475 = vmatpush.msra.mxu0 %v440
      %476 = vmatpush.msra.mxu0 %v439
      %477 = vmatpush.msra.mxu0 %v438
      %478 = vmatpush.msra.mxu0 %v437
      %479 = vmatpush.msra.mxu0 %v436
      %480 = vmatpush.msra.mxu0 %v435
      %481 = vmatpush.msra.mxu0 %v434
      %482 = vmatpush.msra.mxu0 %v433
      %483 = vmatpush.msra.mxu0 %v432
      %484 = vmatmul.f32.gmra.mxu0 %v430
      %v485 = vpop.f32.mrf.mxu0
      %v486 = vadd.f32 %v466, %v485
      %487 = vdwg.mxu0
      %488 = vmatpush.msra.mxu0 %v463
      %489 = vmatpush.msra.mxu0 %v462
      %490 = vmatpush.msra.mxu0 %v461
      %491 = vmatpush.msra.mxu0 %v460
      %492 = vmatpush.msra.mxu0 %v459
      %493 = vmatpush.msra.mxu0 %v458
      %494 = vmatpush.msra.mxu0 %v457
      %495 = vmatpush.msra.mxu0 %v456
      %496 = vmatpush.msra.mxu0 %v455
      %497 = vmatpush.msra.mxu0 %v454
      %498 = vmatpush.msra.mxu0 %v453
      %499 = vmatpush.msra.mxu0 %v452
      %500 = vmatpush.msra.mxu0 %v451
      %501 = vmatpush.msra.mxu0 %v450
      %502 = vmatpush.msra.mxu0 %v449
      %503 = vmatpush.msra.mxu0 %v448
      %504 = vmatmul.f32.gmra.mxu0 %v431
      %v505 = vpop.f32.mrf.mxu0
      %v506 = vadd.f32 %v486, %v505
      %507 = vdwg.mxu0
      %508 = vst [vmem:[#allocation3] sm:$0x3] %v174
      %509 = vst [vmem:[#allocation5] sm:$0x3] %v253
      %511 = vrot.lane.b32.xlu0 %v272, 2
      %v512 = vpop.permute.xlu0 %511
      %vm514 = vcmask 15360
      %v515 = vsel %vm514, %v506, %v512
      %vm516 = vcmask 23552
      %v517 = vsel %vm516, %v515, 0.0
      %518 = vst [vmem:[%s13] sm:$0x3] %v517
    $region53: #{deepfake_detector_forward.1} parent=1 // pred_fallthru
      _
    // Predicated region
    $region54: #{deepfake_detector_forward.1} parent=1 // pred_check
      _
    $region55: #{deepfake_detector_forward.1} parent=1 // pred_check_branch
      %520 = sbr.rel (0) target = $region57
    $region56: #{deepfake_detector_forward.1} parent=1 // pred_region
      %522 = vsyncadd [#allocation4], 0
      %s524 = sshll.u32 [#allocation3], 4
      %s525 = int_to_ptr.vmem [resolvable:$true] %s524
      %s526 = sshll.u32 %s11, 4
      %s527 = int_to_ptr.hbm [resolvable:$true] %s526
      %529 = dma.vmem_to_hbm [thread:$0]  %s525, 32, %s527, [#allocation4]
    $region57: #{deepfake_detector_forward.1} parent=1 // pred_fallthru
      _
    // Predicated region
    $region58: #{deepfake_detector_forward.1} parent=1 // pred_check
      _
    $region59: #{deepfake_detector_forward.1} parent=1 // pred_check_branch
      %531 = sbr.rel (0) target = $region61
    $region60: #{deepfake_detector_forward.1} parent=1 // pred_region
      %533 = vsyncadd [#allocation6], 0
      %s535 = sshll.u32 [#allocation5], 4
      %s536 = int_to_ptr.vmem [resolvable:$true] %s535
      %s537 = sshll.u32 %s12, 4
      %s538 = int_to_ptr.hbm [resolvable:$true] %s537
      %540 = dma.vmem_to_hbm [thread:$0]  %s536, 32, %s538, [#allocation6]
    $region61: #{deepfake_detector_forward.1} parent=1 // pred_fallthru
      _
    // Predicated region
    $region62: #{deepfake_detector_forward.1} parent=1 // pred_check
      _
    $region63: #{deepfake_detector_forward.1} parent=1 // pred_check_branch
      %542 = sbr.rel (0) target = $region65
    $region64: #{deepfake_detector_forward.1} parent=1 // pred_region
      _
    $region65: #{deepfake_detector_forward.1} parent=1 // pred_fallthru
      _
    // Predicated region
    $region66: #{deepfake_detector_forward.1} parent=1 // pred_check
      _
    $region67: #{deepfake_detector_forward.1} parent=1 // pred_check_branch
      %544 = sbr.rel (0) target = $region69
    $region68: #{deepfake_detector_forward.1} parent=1 // pred_region
      %546 = dma.done [#allocation4], 32
    $region69: #{deepfake_detector_forward.1} parent=1 // pred_fallthru
      _
    // Predicated region
    $region70: #{deepfake_detector_forward.1} parent=1 // pred_check
      _
    $region71: #{deepfake_detector_forward.1} parent=1 // pred_check_branch
      %548 = sbr.rel (0) target = $region73
    $region72: #{deepfake_detector_forward.1} parent=1 // pred_region
      %550 = dma.done [#allocation6], 32
    $region73: #{deepfake_detector_forward.1} parent=1 // pred_fallthru
      _
    // Predicated region
    $region74: #{deepfake_detector_forward.1} parent=1 // pred_check
      _
    $region75: #{deepfake_detector_forward.1} parent=1 // pred_check_branch
      %552 = sbr.rel (0) target = $region77
    $region76: #{deepfake_detector_forward.1} parent=1 // pred_region
      _
    $region77: #{deepfake_detector_forward.1} parent=1 // pred_fallthru
      _
    %553 = vsyncpa [#allocation4], 1
    %554 = vsyncpa [#allocation6], 1

</llo_original>
